<compile_context>
chip_gen: v7x
topology: tpu7x:2x2x1
jax: 0.10.0
libtpu: 0.0.40
codegen_flags: <defaults>
</compile_context>

<pallas_src>
import jax
import jax.numpy as jnp
from jax.experimental import pallas as pl
from jax.experimental.pallas import tpu as pltpu


# ----------------------------------------------------------------------------
# Tiled (B, M) @ (M, N) -> (B, N) kernel (the only heavy op in the forward)
# ----------------------------------------------------------------------------
def _dgi_matmul_kernel(t_ref, p_ref, o_ref):
    # t_ref: (B, tm)  centered measurement rows (temp_c tile over M)
    # p_ref: (tm, tn) pattern tile
    # o_ref: (B, tn)  output tile, resident across the M (reduction) axis
    k = pl.program_id(1)

    @pl.when(k == 0)
    def _():
        o_ref[...] = jnp.zeros_like(o_ref)

    o_ref[...] += jnp.dot(
        t_ref[...].astype(jnp.float32),
        p_ref[...].astype(jnp.float32),
        preferred_element_type=jnp.float32,
    )


def _pick_tile(dim, multiple, max_tile):
    """Largest divisor of `dim` that is a multiple of `multiple` and <= max_tile,
    falling back to the full dimension (always a legal block shape)."""
    if dim <= max_tile:
        return dim
    t = max_tile - (max_tile % multiple)
    while t >= multiple:
        if dim % t == 0:
            return t
        t -= multiple
    return dim


def _dgi_matmul(temp_c, p, *, max_tm=256, max_tn=512):
    B, M = temp_c.shape
    _, N = p.shape
    # tm is the LAST dim of temp_c's block -> must be a multiple of 128 (or == M).
    tm = _pick_tile(M, 128, max_tm)
    tn = _pick_tile(N, 128, max_tn)
    grid = (N // tn, M // tm)   # reduction axis (M) last

    return pl.pallas_call(
        _dgi_matmul_kernel,
        out_shape=jax.ShapeDtypeStruct((B, N), jnp.float32),
        grid_spec=pltpu.PrefetchScalarGridSpec(
            num_scalar_prefetch=0,
            grid=grid,
            in_specs=[
                pl.BlockSpec((B, tm), lambda j, k: (0, k)),
                pl.BlockSpec((tm, tn), lambda j, k: (k, j)),
            ],
            out_specs=pl.BlockSpec((B, tn), lambda j, k: (0, j)),
        ),
        compiler_params=pltpu.CompilerParams(
            dimension_semantics=("parallel", "arbitrary")),
    )(temp_c, p)


# ----------------------------------------------------------------------------
# Full forward
# ----------------------------------------------------------------------------
def dgi_reconstruction(y, patterns, batchsize, M, W, H, g_factor=0.5):
    """JAX/Pallas equivalent of DGI_reconstruction.forward."""
    B = batchsize
    N = W * H
    out = jnp.reshape(y, (B, M)).astype(jnp.float32)         # (B, M)  tiny
    p = jnp.reshape(patterns, (M, N))                         # (M, N)  native dtype

    # Tiny global reductions (one fused HBM pass over p), done in XLA so the
    # kernel has no full-M dependency and can stream p tile by tile.
    comput2 = jnp.sum(p.astype(jnp.float32), axis=1)          # (M,)
    gamma = (g_factor * jnp.mean(out, axis=1) / jnp.mean(comput2))[:, None]  # (B,1)
    temp = out - gamma * comput2[None, :]                     # (B, M)
    temp_c = temp - jnp.mean(temp, axis=1, keepdims=True)     # rows centered over M

    # DGI^T = temp_c @ p  (pattern centering dropped: exact because each row of
    # temp_c sums to zero, so the rank-1 mean term cancels).
    dgi_bn = _dgi_matmul(temp_c, p)                           # (B, N) f32, lane-dense

    # Global min/max normalization on the tiny (B, N) result (fused XLA op).
    d_min = jnp.min(dgi_bn)
    d_max = jnp.max(dgi_bn)
    dgi_bn = (dgi_bn - d_min) / (d_max - d_min)

    # Faithfully reproduce the reference's `DGI.view(B, 1, W, H)`, which
    # reinterprets the contiguous (N, B) buffer row-major.
    return jnp.reshape(jnp.transpose(dgi_bn), (B, 1, W, H))


# ----------------------------------------------------------------------------
# Pure-JAX reference (mirrors the PyTorch code line by line)
# ----------------------------------------------------------------------------
def _dgi_reference(y, patterns, batchsize, M, W, H, g_factor=0.5):
    out = jnp.reshape(y, (batchsize, M)).astype(jnp.float32)
    p = jnp.reshape(patterns, (M, W * H)).astype(jnp.float32)
    comput1 = jnp.transpose(p - jnp.mean(p, axis=0, keepdims=True))      # (N, M)
    comput2 = jnp.sum(p, axis=1)                                         # (M,)
    gamma = g_factor * jnp.mean(out, axis=1) / jnp.mean(comput2)         # (B,)
    temp = out - gamma[:, None] * comput2[None, :]                       # (B, M)
    temp = jnp.transpose(temp)                                           # (M, B)
    temp = temp - jnp.mean(temp, axis=0, keepdims=True)
    dgi = jnp.dot(comput1, temp, precision=jax.lax.Precision.HIGHEST)    # (N, B)
    dgi = (dgi - jnp.min(dgi)) / (jnp.max(dgi) - jnp.min(dgi))
    return jnp.reshape(dgi, (batchsize, 1, W, H))


# ----------------------------------------------------------------------------
# Test
# ----------------------------------------------------------------------------
if __name__ == "__main__":
    # Small but grid-exercising shapes: grid = (N//tn, M//tm) = (2, 2).
    B, M, W, H = 2, 512, 32, 32
    key = jax.random.PRNGKey(0)
    k_pat, k_img = jax.random.split(key)

    # Illumination patterns and bucket measurements y[b, m] = <pattern_m, scene_b>.
    patterns = jax.random.uniform(k_pat, (M, 1, W, H), jnp.float32)
    scenes = jax.random.uniform(k_img, (B, W * H), jnp.float32)
    y = jnp.reshape(scenes @ jnp.reshape(patterns, (M, W * H)).T, (B, M, 1, 1))

    fwd = jax.jit(dgi_reconstruction, static_argnums=(2, 3, 4, 5))
    out = fwd(y, patterns, B, M, W, H)
    out = jax.block_until_ready(out)

    ref = _dgi_reference(y, patterns, B, M, W, H)

    assert out.shape == (B, 1, W, H), out.shape
    assert bool(jnp.all(jnp.isfinite(out)))
    max_err = float(jnp.max(jnp.abs(out - ref)))
    assert max_err < 5e-3, f"max_err={max_err}"
    print("KERNEL_OK")
</pallas_src>

<mosaic_0001>
module attributes {stable_mosaic.version = 11 : i64} {
  func.func @_dgi_matmul_kernel(%arg0: i32, %arg1: i32, %arg2: memref<2x256xf32, #tpu.memory_space<vmem>>, %arg3: memref<256x512xf32, #tpu.memory_space<vmem>>, %arg4: memref<2x512xf32, #tpu.memory_space<vmem>>) attributes {dimension_semantics = [#tpu.dimension_semantics<parallel>, #tpu.dimension_semantics<arbitrary>], iteration_bounds = array<i64: 2, 2>, scalar_prefetch = 0 : i64, scratch_operands = 0 : i64, tpu.core_type = #tpu.core_type<tc>, window_params = [{transform_indices = @transform_0, window_bounds = array<i64: 2, 256>}, {transform_indices = @transform_1, window_bounds = array<i64: 256, 512>}, {transform_indices = @transform_2, window_bounds = array<i64: 2, 512>}]} {
    %c0_i32 = arith.constant 0 : i32
    %0 = arith.cmpi eq, %arg1, %c0_i32 : i32
    %1 = arith.extui %0 : i1 to i32
    %c0_i32_0 = arith.constant 0 : i32
    %2 = arith.cmpi ne, %1, %c0_i32_0 : i32
    scf.if %2 {
      %cst_8 = arith.constant 0.000000e+00 : f32
      %9 = vector.broadcast %cst_8 : f32 to vector<2x512xf32>
      %c0_9 = arith.constant 0 : index
      %c0_10 = arith.constant 0 : index
      %10 = vector.load %arg4[%c0_9, %c0_10] : memref<2x512xf32, #tpu.memory_space<vmem>>, vector<2x512xf32>
      tpu.vector_store %arg4[%c0_9, %c0_10], %9 {strides = array<i32>} : memref<2x512xf32, #tpu.memory_space<vmem>>, vector<2x512xf32>,
    } else {
    }
    %c0 = arith.constant 0 : index
    %c0_1 = arith.constant 0 : index
    %3 = vector.load %arg4[%c0, %c0_1] : memref<2x512xf32, #tpu.memory_space<vmem>>, vector<2x512xf32>
    %c0_2 = arith.constant 0 : index
    %c0_3 = arith.constant 0 : index
    %4 = vector.load %arg2[%c0_2, %c0_3] : memref<2x256xf32, #tpu.memory_space<vmem>>, vector<2x256xf32>
    %c0_4 = arith.constant 0 : index
    %c0_5 = arith.constant 0 : index
    %5 = vector.load %arg3[%c0_4, %c0_5] : memref<256x512xf32, #tpu.memory_space<vmem>>, vector<256x512xf32>
    %cst = arith.constant dense<0.000000e+00> : vector<2x512xf32>
    %6 = tpu.matmul %4, %5, %cst {dimension_numbers = #tpu.dot_dimension_numbers<[1], [0], [0], [1], [0, 0, 1, 1], [], []>} : vector<2x256xf32>, vector<256x512xf32>, vector<2x512xf32> -> vector<2x512xf32>
    %7 = arith.addf %3, %6 : vector<2x512xf32>
    %c0_6 = arith.constant 0 : index
    %c0_7 = arith.constant 0 : index
    %8 = vector.load %arg4[%c0_6, %c0_7] : memref<2x512xf32, #tpu.memory_space<vmem>>, vector<2x512xf32>
    tpu.vector_store %arg4[%c0_6, %c0_7], %7 {strides = array<i32>} : memref<2x512xf32, #tpu.memory_space<vmem>>, vector<2x512xf32>,
    return
  }
  func.func @transform_0(%arg0: i32, %arg1: i32) -> (i32, i32) {
    %c0_i32 = arith.constant 0 : i32
    %c0_i32_0 = arith.constant 0 : i32
    return %c0_i32, %arg1 : i32, i32
  }
  func.func @transform_1(%arg0: i32, %arg1: i32) -> (i32, i32) {
    %c0_i32 = arith.constant 0 : i32
    return %arg1, %arg0 : i32, i32
  }
  func.func @transform_2(%arg0: i32, %arg1: i32) -> (i32, i32) {
    %c0_i32 = arith.constant 0 : i32
    %c0_i32_0 = arith.constant 0 : i32
    return %c0_i32, %arg0 : i32, i32
  }
}

</mosaic_0001>

<llo_original>
// kernel: dgi_reconstruction.1
$region0: #{dgi_reconstruction.1}
  #allocation0 [shape = 'u32[]', space=smem, size = 0x4, offset = 0x4, fixed_abs, tag = 'smem constant byte address 0x4 - core index']
  #allocation1 [shape = 'u32[144,128]{1,0:T(1,128)}', space=vmem, size = 0x12000, scoped, tag = 'internal scratch']
  %s0 = inlined_call_operand.vmem [shape: f32[2,512], index: 0, kind: input, shape index: {}]
  %s1 = inlined_call_operand.vmem [shape: f32[512,1024], index: 1, kind: input, shape index: {}]
  %s2 = inlined_call_operand.vmem [shape: f32[2,1024], index: 2, kind: output, shape index: {}]
  %s3 = sld [smem:[#allocation0]]
  $region68: #{dgi_reconstruction.1} parent=0
    _
  %s5 = ssub.s32 1, %s3
  %s6 = scalar_select 0, %s5, %s3
  $region1: #{dgi_reconstruction.1} parent=0
    #allocation2 [shape = 'u8[1048576]{0}', space=vmem, size = 0x100000, scoped, tag = 'input window, operand 1']
    loop: start=0, step=1, limit=6
    $region2: #{dgi_reconstruction.1} parent=1 // loop_pre_header
      _
    $region3: #{dgi_reconstruction.1} parent=1 // loop_header
      %s8 = sphi 0, %s12
      %p9 = scmp.ge.s32.totalorder %s8, 6
      %s15 = sphi 0, %s27
      %s16 = sphi 0, %s23
      %s17 = sphi 0, %s15
      %s18 = sphi 0, %s16
      %s19 = sphi 0, %s17
      %s20 = sphi 0, %s18
      %s30 = sphi 0, %s32
      %s33 = sphi 0, %s30
      %s34 = sphi 0, %s33
      %s50 = sphi 0, %s34
      %s58 = sphi 0, %s60
      %s61 = sphi 0, %s58
      %s62 = sphi 0, %s61
      %s78 = sphi 0, %s62
      %s84 = sphi 0, %s86
      %s87 = sphi 0, %s84
      %s88 = sphi 0, %s87
      %s104 = sphi 0, %s88
    $region4: #{dgi_reconstruction.1} parent=1 // loop_header_branch
      %11 = sbr.rel (%p9) target = $region8
    $region5: #{dgi_reconstruction.1} parent=1 // loop_body
      %s13 = ssub.s32 %s8, 1
      %s14 = ssub.s32 %s8, 2
      %s21 = sadd.s32 1, %s16
      %p22 = scmp.ge.s32.totalorder %s21, 2
      %s23 = scalar_select %p22, 0, %s21
      %s24 = sadd.s32 1, %s15
      %s25 = scalar_select %p22, %s24, %s15
      %p26 = scmp.ge.s32.totalorder %s25, 2
      %s27 = scalar_select %p26, 0, %s25
      %s28 = ssub.s32 %s16, %s23
      %p29 = scmp.eq.s32.totalorder %s28, 0
      %s31 = sadd.s32 %s30, 1
      %s32 = scalar_select %p29, %s30, %s31
      %p35 = pneg %p29
      %p36 = scmp.eq.s32.totalorder %s8, 3
      %p37 = por %p35, %p36
      %p38 = scmp.ne.s32.totalorder %s30, %s33
      %p39 = scmp.eq.s32.totalorder %s8, 0
      %p40 = por %p38, %p39
      %p41 = scmp.ne.s32.totalorder %s30, %s33
      %p42 = scmp.eq.s32.totalorder %s13, 3
      %p43 = por %p41, %p42
      %p44 = scmp.ne.s32.totalorder %s33, %s34
      %p45 = scmp.eq.s32.totalorder %s13, 0
      %p46 = por %p44, %p45
      %p47 = scmp.ne.s32.totalorder %s33, %s34
      %p48 = scmp.eq.s32.totalorder %s14, 3
      %p49 = por %p47, %p48
      %p51 = scmp.ne.s32.totalorder %s34, %s50
      %p52 = scmp.eq.s32.totalorder %s14, 0
      %p53 = por %p51, %p52
      %s54 = ssub.s32 %s16, %s23
      %s55 = ssub.s32 %s15, %s27
      %s56 = sor.u32 %s54, %s55
      %p57 = scmp.eq.s32.totalorder %s56, 0
      %s59 = sadd.s32 %s58, 1
      %s60 = scalar_select %p57, %s58, %s59
      %p63 = pneg %p57
      %p64 = scmp.eq.s32.totalorder %s8, 3
      %p65 = por %p63, %p64
      %p66 = scmp.ne.s32.totalorder %s58, %s61
      %p67 = scmp.eq.s32.totalorder %s8, 0
      %p68 = por %p66, %p67
      %p69 = scmp.ne.s32.totalorder %s58, %s61
      %p70 = scmp.eq.s32.totalorder %s13, 3
      %p71 = por %p69, %p70
      %p72 = scmp.ne.s32.totalorder %s61, %s62
      %p73 = scmp.eq.s32.totalorder %s13, 0
      %p74 = por %p72, %p73
      %p75 = scmp.ne.s32.totalorder %s61, %s62
      %p76 = scmp.eq.s32.totalorder %s14, 3
      %p77 = por %p75, %p76
      %p79 = scmp.ne.s32.totalorder %s62, %s78
      %p80 = scmp.eq.s32.totalorder %s14, 0
      %p81 = por %p79, %p80
      %s82 = ssub.s32 %s15, %s27
      %p83 = scmp.eq.s32.totalorder %s82, 0
      %s85 = sadd.s32 %s84, 1
      %s86 = scalar_select %p83, %s84, %s85
      %p89 = pneg %p83
      %p90 = scmp.eq.s32.totalorder %s8, 3
      %p91 = por %p89, %p90
      %p92 = scmp.ne.s32.totalorder %s84, %s87
      %p93 = scmp.eq.s32.totalorder %s8, 0
      %p94 = por %p92, %p93
      %p95 = scmp.ne.s32.totalorder %s84, %s87
      %p96 = scmp.eq.s32.totalorder %s13, 3
      %p97 = por %p95, %p96
      %p98 = scmp.ne.s32.totalorder %s87, %s88
      %p99 = scmp.eq.s32.totalorder %s13, 0
      %p100 = por %p98, %p99
      %p101 = scmp.ne.s32.totalorder %s87, %s88
      %p102 = scmp.eq.s32.totalorder %s14, 3
      %p103 = por %p101, %p102
      %p105 = scmp.ne.s32.totalorder %s88, %s104
      %p106 = scmp.eq.s32.totalorder %s14, 0
      %p107 = por %p105, %p106
      %p108 = scmp.le.s32.totalorder 1, %s8
      %p109 = scmp.lt.s32.totalorder %s8, 5
      %p110 = pnand %p108, %p109
      %p111 = pneg %p110
      // Predicated region
      $region9: #{dgi_reconstruction.1} parent=5 // pred_check
        _
      $region10: #{dgi_reconstruction.1} parent=5 // pred_check_branch
        %113 = sbr.rel (%p110) target = $region12
      $region11: #{dgi_reconstruction.1} parent=5 // pred_region
        %s114 = ssub.s32 %s8, 1
      $region12: #{dgi_reconstruction.1} parent=5 // pred_fallthru
        _
      %p115 = scmp.lt.s32.totalorder %s8, 4
      // Predicated region
      $region13: #{dgi_reconstruction.1} parent=5 // pred_check
        %p116 = pneg %p115
      $region14: #{dgi_reconstruction.1} parent=5 // pred_check_branch
        %118 = sbr.rel (%p116) target = $region16
      $region15: #{dgi_reconstruction.1} parent=5 // pred_region
        // Predicated region
        $region17: #{dgi_reconstruction.1} parent=15 // pred_check
          %p119 = pneg %p40
        $region18: #{dgi_reconstruction.1} parent=15 // pred_check_branch
          %121 = sbr.rel (%p119) target = $region20
        $region19: #{dgi_reconstruction.1} parent=15 // pred_region
          %s122 = smul.u32 2, %s16
          %p123 = scmp.lt.s32.totalorder %s122, 3
          %s124 = scalar_select %p123, %s122, 3
          %s125 = smul.addr %s124, 2
          %s126 = scalar_lea.vmem %s0, %s125
          %s127 = smul.u32 2, %s16
        $region20: #{dgi_reconstruction.1} parent=15 // pred_fallthru
          _
        // Predicated region
        $region21: #{dgi_reconstruction.1} parent=15 // pred_check
          %p128 = pneg %p68
        $region22: #{dgi_reconstruction.1} parent=15 // pred_check_branch
          %130 = sbr.rel (%p128) target = $region24
        $region23: #{dgi_reconstruction.1} parent=15 // pred_region
          %s131 = sand.u32 %s58, 1
          %s132 = sand.u32 %s58, 1
          %s133 = smul.addr %s132, 1024
          %s134 = scalar_lea.vmem [#allocation2], %s133
          %s135 = smul.u32 32, %s16
          %s136 = smul.u32 4, %s15
          %s137 = smul.addr %s135, 8
          %s138 = sadd.s32 %s136, %s137
          %s139 = smul.addr %s138, 8
          %s140 = scalar_lea.vmem %s1, %s139
          // Predicated region
          $region25: #{dgi_reconstruction.1} parent=23 // pred_check
            _
          $region26: #{dgi_reconstruction.1} parent=23 // pred_check_branch
            %142 = sbr.rel (0) target = $region28
          $region27: #{dgi_reconstruction.1} parent=23 // pred_region
            // Predicated region
            $region29: #{dgi_reconstruction.1} parent=27 // pred_check
              _
            $region30: #{dgi_reconstruction.1} parent=27 // pred_check_branch
              %144 = sbr.rel (0) target = $region32
            $region31: #{dgi_reconstruction.1} parent=27 // pred_region
              loop: start=0, step=1, limit=1
              $region33: #{dgi_reconstruction.1} parent=31 // loop_pre_header
                _
              $region34: #{dgi_reconstruction.1} parent=31 // loop_header
                %s146 = sphi 0, %s150
                %p147 = scmp.ge.s32.totalorder %s146, 1
                %s151 = sphi %s140, %s140
                %s152 = sphi %s134, %s134
              $region35: #{dgi_reconstruction.1} parent=31 // loop_header_branch
                %149 = sbr.rel (%p147) target = $region39
              $region36: #{dgi_reconstruction.1} parent=31 // loop_body
                %v153 = vld [vmem:[%s151] sm:$0xff]
                %154 = vst [vmem:[%s152] sm:$0xff] %v153
                %v155 = vld [vmem:[%s151 + $0x8] sm:$0xff]
                %156 = vst [vmem:[%s152 + $0x8] sm:$0xff] %v155
                %v157 = vld [vmem:[%s151 + $0x10] sm:$0xff]
                %158 = vst [vmem:[%s152 + $0x10] sm:$0xff] %v157
                %v159 = vld [vmem:[%s151 + $0x18] sm:$0xff]
                %160 = vst [vmem:[%s152 + $0x18] sm:$0xff] %v159
                %v161 = vld [vmem:[%s151 + $0x40] sm:$0xff]
                %162 = vst [vmem:[%s152 + $0x20] sm:$0xff] %v161
                %v163 = vld [vmem:[%s151 + $0x48] sm:$0xff]
                %164 = vst [vmem:[%s152 + $0x28] sm:$0xff] %v163
                %v165 = vld [vmem:[%s151 + $0x50] sm:$0xff]
                %166 = vst [vmem:[%s152 + $0x30] sm:$0xff] %v165
                %v167 = vld [vmem:[%s151 + $0x58] sm:$0xff]
                %168 = vst [vmem:[%s152 + $0x38] sm:$0xff] %v167
                %v169 = vld [vmem:[%s151 + $0x80] sm:$0xff]
                %170 = vst [vmem:[%s152 + $0x40] sm:$0xff] %v169
                %v171 = vld [vmem:[%s151 + $0x88] sm:$0xff]
                %172 = vst [vmem:[%s152 + $0x48] sm:$0xff] %v171
                %v173 = vld [vmem:[%s151 + $0x90] sm:$0xff]
                %174 = vst [vmem:[%s152 + $0x50] sm:$0xff] %v173
                %v175 = vld [vmem:[%s151 + $0x98] sm:$0xff]
                %176 = vst [vmem:[%s152 + $0x58] sm:$0xff] %v175
                %v177 = vld [vmem:[%s151 + $0xc0] sm:$0xff]
                %178 = vst [vmem:[%s152 + $0x60] sm:$0xff] %v177
                %v179 = vld [vmem:[%s151 + $0xc8] sm:$0xff]
                %180 = vst [vmem:[%s152 + $0x68] sm:$0xff] %v179
                %v181 = vld [vmem:[%s151 + $0xd0] sm:$0xff]
                %182 = vst [vmem:[%s152 + $0x70] sm:$0xff] %v181
                %v183 = vld [vmem:[%s151 + $0xd8] sm:$0xff]
                %184 = vst [vmem:[%s152 + $0x78] sm:$0xff] %v183
                %v185 = vld [vmem:[%s151 + $0x100] sm:$0xff]
                %186 = vst [vmem:[%s152 + $0x80] sm:$0xff] %v185
                %v187 = vld [vmem:[%s151 + $0x108] sm:$0xff]
                %188 = vst [vmem:[%s152 + $0x88] sm:$0xff] %v187
                %v189 = vld [vmem:[%s151 + $0x110] sm:$0xff]
                %190 = vst [vmem:[%s152 + $0x90] sm:$0xff] %v189
                %v191 = vld [vmem:[%s151 + $0x118] sm:$0xff]
                %192 = vst [vmem:[%s152 + $0x98] sm:$0xff] %v191
                %v193 = vld [vmem:[%s151 + $0x140] sm:$0xff]
                %194 = vst [vmem:[%s152 + $0xa0] sm:$0xff] %v193
                %v195 = vld [vmem:[%s151 + $0x148] sm:$0xff]
                %196 = vst [vmem:[%s152 + $0xa8] sm:$0xff] %v195
                %v197 = vld [vmem:[%s151 + $0x150] sm:$0xff]
                %198 = vst [vmem:[%s152 + $0xb0] sm:$0xff] %v197
                %v199 = vld [vmem:[%s151 + $0x158] sm:$0xff]
                %200 = vst [vmem:[%s152 + $0xb8] sm:$0xff] %v199
                %v201 = vld [vmem:[%s151 + $0x180] sm:$0xff]
                %202 = vst [vmem:[%s152 + $0xc0] sm:$0xff] %v201
                %v203 = vld [vmem:[%s151 + $0x188] sm:$0xff]
                %204 = vst [vmem:[%s152 + $0xc8] sm:$0xff] %v203
                %v205 = vld [vmem:[%s151 + $0x190] sm:$0xff]
                %206 = vst [vmem:[%s152 + $0xd0] sm:$0xff] %v205
                %v207 = vld [vmem:[%s151 + $0x198] sm:$0xff]
                %208 = vst [vmem:[%s152 + $0xd8] sm:$0xff] %v207
                %v209 = vld [vmem:[%s151 + $0x1c0] sm:$0xff]
                %210 = vst [vmem:[%s152 + $0xe0] sm:$0xff] %v209
                %v211 = vld [vmem:[%s151 + $0x1c8] sm:$0xff]
                %212 = vst [vmem:[%s152 + $0xe8] sm:$0xff] %v211
                %v213 = vld [vmem:[%s151 + $0x1d0] sm:$0xff]
                %214 = vst [vmem:[%s152 + $0xf0] sm:$0xff] %v213
                %v215 = vld [vmem:[%s151 + $0x1d8] sm:$0xff]
                %216 = vst [vmem:[%s152 + $0xf8] sm:$0xff] %v215
                %v217 = vld [vmem:[%s151 + $0x200] sm:$0xff]
                %218 = vst [vmem:[%s152 + $0x100] sm:$0xff] %v217
                %v219 = vld [vmem:[%s151 + $0x208] sm:$0xff]
                %220 = vst [vmem:[%s152 + $0x108] sm:$0xff] %v219
                %v221 = vld [vmem:[%s151 + $0x210] sm:$0xff]
                %222 = vst [vmem:[%s152 + $0x110] sm:$0xff] %v221
                %v223 = vld [vmem:[%s151 + $0x218] sm:$0xff]
                %224 = vst [vmem:[%s152 + $0x118] sm:$0xff] %v223
                %v225 = vld [vmem:[%s151 + $0x240] sm:$0xff]
                %226 = vst [vmem:[%s152 + $0x120] sm:$0xff] %v225
                %v227 = vld [vmem:[%s151 + $0x248] sm:$0xff]
                %228 = vst [vmem:[%s152 + $0x128] sm:$0xff] %v227
                %v229 = vld [vmem:[%s151 + $0x250] sm:$0xff]
                %230 = vst [vmem:[%s152 + $0x130] sm:$0xff] %v229
                %v231 = vld [vmem:[%s151 + $0x258] sm:$0xff]
                %232 = vst [vmem:[%s152 + $0x138] sm:$0xff] %v231
                %v233 = vld [vmem:[%s151 + $0x280] sm:$0xff]
                %234 = vst [vmem:[%s152 + $0x140] sm:$0xff] %v233
                %v235 = vld [vmem:[%s151 + $0x288] sm:$0xff]
                %236 = vst [vmem:[%s152 + $0x148] sm:$0xff] %v235
                %v237 = vld [vmem:[%s151 + $0x290] sm:$0xff]
                %238 = vst [vmem:[%s152 + $0x150] sm:$0xff] %v237
                %v239 = vld [vmem:[%s151 + $0x298] sm:$0xff]
                %240 = vst [vmem:[%s152 + $0x158] sm:$0xff] %v239
                %v241 = vld [vmem:[%s151 + $0x2c0] sm:$0xff]
                %242 = vst [vmem:[%s152 + $0x160] sm:$0xff] %v241
                %v243 = vld [vmem:[%s151 + $0x2c8] sm:$0xff]
                %244 = vst [vmem:[%s152 + $0x168] sm:$0xff] %v243
                %v245 = vld [vmem:[%s151 + $0x2d0] sm:$0xff]
                %246 = vst [vmem:[%s152 + $0x170] sm:$0xff] %v245
                %v247 = vld [vmem:[%s151 + $0x2d8] sm:$0xff]
                %248 = vst [vmem:[%s152 + $0x178] sm:$0xff] %v247
                %v249 = vld [vmem:[%s151 + $0x300] sm:$0xff]
                %250 = vst [vmem:[%s152 + $0x180] sm:$0xff] %v249
                %v251 = vld [vmem:[%s151 + $0x308] sm:$0xff]
                %252 = vst [vmem:[%s152 + $0x188] sm:$0xff] %v251
                %v253 = vld [vmem:[%s151 + $0x310] sm:$0xff]
                %254 = vst [vmem:[%s152 + $0x190] sm:$0xff] %v253
                %v255 = vld [vmem:[%s151 + $0x318] sm:$0xff]
                %256 = vst [vmem:[%s152 + $0x198] sm:$0xff] %v255
                %v257 = vld [vmem:[%s151 + $0x340] sm:$0xff]
                %258 = vst [vmem:[%s152 + $0x1a0] sm:$0xff] %v257
                %v259 = vld [vmem:[%s151 + $0x348] sm:$0xff]
                %260 = vst [vmem:[%s152 + $0x1a8] sm:$0xff] %v259
                %v261 = vld [vmem:[%s151 + $0x350] sm:$0xff]
                %262 = vst [vmem:[%s152 + $0x1b0] sm:$0xff] %v261
                %v263 = vld [vmem:[%s151 + $0x358] sm:$0xff]
                %264 = vst [vmem:[%s152 + $0x1b8] sm:$0xff] %v263
                %v265 = vld [vmem:[%s151 + $0x380] sm:$0xff]
                %266 = vst [vmem:[%s152 + $0x1c0] sm:$0xff] %v265
                %v267 = vld [vmem:[%s151 + $0x388] sm:$0xff]
                %268 = vst [vmem:[%s152 + $0x1c8] sm:$0xff] %v267
                %v269 = vld [vmem:[%s151 + $0x390] sm:$0xff]
                %270 = vst [vmem:[%s152 + $0x1d0] sm:$0xff] %v269
                %v271 = vld [vmem:[%s151 + $0x398] sm:$0xff]
                %272 = vst [vmem:[%s152 + $0x1d8] sm:$0xff] %v271
                %v273 = vld [vmem:[%s151 + $0x3c0] sm:$0xff]
                %274 = vst [vmem:[%s152 + $0x1e0] sm:$0xff] %v273
                %v275 = vld [vmem:[%s151 + $0x3c8] sm:$0xff]
                %276 = vst [vmem:[%s152 + $0x1e8] sm:$0xff] %v275
                %v277 = vld [vmem:[%s151 + $0x3d0] sm:$0xff]
                %278 = vst [vmem:[%s152 + $0x1f0] sm:$0xff] %v277
                %v279 = vld [vmem:[%s151 + $0x3d8] sm:$0xff]
                %280 = vst [vmem:[%s152 + $0x1f8] sm:$0xff] %v279
                %v281 = vld [vmem:[%s151 + $0x400] sm:$0xff]
                %282 = vst [vmem:[%s152 + $0x200] sm:$0xff] %v281
                %v283 = vld [vmem:[%s151 + $0x408] sm:$0xff]
                %284 = vst [vmem:[%s152 + $0x208] sm:$0xff] %v283
                %v285 = vld [vmem:[%s151 + $0x410] sm:$0xff]
                %286 = vst [vmem:[%s152 + $0x210] sm:$0xff] %v285
                %v287 = vld [vmem:[%s151 + $0x418] sm:$0xff]
                %288 = vst [vmem:[%s152 + $0x218] sm:$0xff] %v287
                %v289 = vld [vmem:[%s151 + $0x440] sm:$0xff]
                %290 = vst [vmem:[%s152 + $0x220] sm:$0xff] %v289
                %v291 = vld [vmem:[%s151 + $0x448] sm:$0xff]
                %292 = vst [vmem:[%s152 + $0x228] sm:$0xff] %v291
                %v293 = vld [vmem:[%s151 + $0x450] sm:$0xff]
                %294 = vst [vmem:[%s152 + $0x230] sm:$0xff] %v293
                %v295 = vld [vmem:[%s151 + $0x458] sm:$0xff]
                %296 = vst [vmem:[%s152 + $0x238] sm:$0xff] %v295
                %v297 = vld [vmem:[%s151 + $0x480] sm:$0xff]
                %298 = vst [vmem:[%s152 + $0x240] sm:$0xff] %v297
                %v299 = vld [vmem:[%s151 + $0x488] sm:$0xff]
                %300 = vst [vmem:[%s152 + $0x248] sm:$0xff] %v299
                %v301 = vld [vmem:[%s151 + $0x490] sm:$0xff]
                %302 = vst [vmem:[%s152 + $0x250] sm:$0xff] %v301
                %v303 = vld [vmem:[%s151 + $0x498] sm:$0xff]
                %304 = vst [vmem:[%s152 + $0x258] sm:$0xff] %v303
                %v305 = vld [vmem:[%s151 + $0x4c0] sm:$0xff]
                %306 = vst [vmem:[%s152 + $0x260] sm:$0xff] %v305
                %v307 = vld [vmem:[%s151 + $0x4c8] sm:$0xff]
                %308 = vst [vmem:[%s152 + $0x268] sm:$0xff] %v307
                %v309 = vld [vmem:[%s151 + $0x4d0] sm:$0xff]
                %310 = vst [vmem:[%s152 + $0x270] sm:$0xff] %v309
                %v311 = vld [vmem:[%s151 + $0x4d8] sm:$0xff]
                %312 = vst [vmem:[%s152 + $0x278] sm:$0xff] %v311
                %v313 = vld [vmem:[%s151 + $0x500] sm:$0xff]
                %314 = vst [vmem:[%s152 + $0x280] sm:$0xff] %v313
                %v315 = vld [vmem:[%s151 + $0x508] sm:$0xff]
                %316 = vst [vmem:[%s152 + $0x288] sm:$0xff] %v315
                %v317 = vld [vmem:[%s151 + $0x510] sm:$0xff]
                %318 = vst [vmem:[%s152 + $0x290] sm:$0xff] %v317
                %v319 = vld [vmem:[%s151 + $0x518] sm:$0xff]
                %320 = vst [vmem:[%s152 + $0x298] sm:$0xff] %v319
                %v321 = vld [vmem:[%s151 + $0x540] sm:$0xff]
                %322 = vst [vmem:[%s152 + $0x2a0] sm:$0xff] %v321
                %v323 = vld [vmem:[%s151 + $0x548] sm:$0xff]
                %324 = vst [vmem:[%s152 + $0x2a8] sm:$0xff] %v323
                %v325 = vld [vmem:[%s151 + $0x550] sm:$0xff]
                %326 = vst [vmem:[%s152 + $0x2b0] sm:$0xff] %v325
                %v327 = vld [vmem:[%s151 + $0x558] sm:$0xff]
                %328 = vst [vmem:[%s152 + $0x2b8] sm:$0xff] %v327
                %v329 = vld [vmem:[%s151 + $0x580] sm:$0xff]
                %330 = vst [vmem:[%s152 + $0x2c0] sm:$0xff] %v329
                %v331 = vld [vmem:[%s151 + $0x588] sm:$0xff]
                %332 = vst [vmem:[%s152 + $0x2c8] sm:$0xff] %v331
                %v333 = vld [vmem:[%s151 + $0x590] sm:$0xff]
                %334 = vst [vmem:[%s152 + $0x2d0] sm:$0xff] %v333
                %v335 = vld [vmem:[%s151 + $0x598] sm:$0xff]
                %336 = vst [vmem:[%s152 + $0x2d8] sm:$0xff] %v335
                %v337 = vld [vmem:[%s151 + $0x5c0] sm:$0xff]
                %338 = vst [vmem:[%s152 + $0x2e0] sm:$0xff] %v337
                %v339 = vld [vmem:[%s151 + $0x5c8] sm:$0xff]
                %340 = vst [vmem:[%s152 + $0x2e8] sm:$0xff] %v339
                %v341 = vld [vmem:[%s151 + $0x5d0] sm:$0xff]
                %342 = vst [vmem:[%s152 + $0x2f0] sm:$0xff] %v341
                %v343 = vld [vmem:[%s151 + $0x5d8] sm:$0xff]
                %344 = vst [vmem:[%s152 + $0x2f8] sm:$0xff] %v343
                %v345 = vld [vmem:[%s151 + $0x600] sm:$0xff]
                %346 = vst [vmem:[%s152 + $0x300] sm:$0xff] %v345
                %v347 = vld [vmem:[%s151 + $0x608] sm:$0xff]
                %348 = vst [vmem:[%s152 + $0x308] sm:$0xff] %v347
                %v349 = vld [vmem:[%s151 + $0x610] sm:$0xff]
                %350 = vst [vmem:[%s152 + $0x310] sm:$0xff] %v349
                %v351 = vld [vmem:[%s151 + $0x618] sm:$0xff]
                %352 = vst [vmem:[%s152 + $0x318] sm:$0xff] %v351
                %v353 = vld [vmem:[%s151 + $0x640] sm:$0xff]
                %354 = vst [vmem:[%s152 + $0x320] sm:$0xff] %v353
                %v355 = vld [vmem:[%s151 + $0x648] sm:$0xff]
                %356 = vst [vmem:[%s152 + $0x328] sm:$0xff] %v355
                %v357 = vld [vmem:[%s151 + $0x650] sm:$0xff]
                %358 = vst [vmem:[%s152 + $0x330] sm:$0xff] %v357
                %v359 = vld [vmem:[%s151 + $0x658] sm:$0xff]
                %360 = vst [vmem:[%s152 + $0x338] sm:$0xff] %v359
                %v361 = vld [vmem:[%s151 + $0x680] sm:$0xff]
                %362 = vst [vmem:[%s152 + $0x340] sm:$0xff] %v361
                %v363 = vld [vmem:[%s151 + $0x688] sm:$0xff]
                %364 = vst [vmem:[%s152 + $0x348] sm:$0xff] %v363
                %v365 = vld [vmem:[%s151 + $0x690] sm:$0xff]
                %366 = vst [vmem:[%s152 + $0x350] sm:$0xff] %v365
                %v367 = vld [vmem:[%s151 + $0x698] sm:$0xff]
                %368 = vst [vmem:[%s152 + $0x358] sm:$0xff] %v367
                %v369 = vld [vmem:[%s151 + $0x6c0] sm:$0xff]
                %370 = vst [vmem:[%s152 + $0x360] sm:$0xff] %v369
                %v371 = vld [vmem:[%s151 + $0x6c8] sm:$0xff]
                %372 = vst [vmem:[%s152 + $0x368] sm:$0xff] %v371
                %v373 = vld [vmem:[%s151 + $0x6d0] sm:$0xff]
                %374 = vst [vmem:[%s152 + $0x370] sm:$0xff] %v373
                %v375 = vld [vmem:[%s151 + $0x6d8] sm:$0xff]
                %376 = vst [vmem:[%s152 + $0x378] sm:$0xff] %v375
                %v377 = vld [vmem:[%s151 + $0x700] sm:$0xff]
                %378 = vst [vmem:[%s152 + $0x380] sm:$0xff] %v377
                %v379 = vld [vmem:[%s151 + $0x708] sm:$0xff]
                %380 = vst [vmem:[%s152 + $0x388] sm:$0xff] %v379
                %v381 = vld [vmem:[%s151 + $0x710] sm:$0xff]
                %382 = vst [vmem:[%s152 + $0x390] sm:$0xff] %v381
                %v383 = vld [vmem:[%s151 + $0x718] sm:$0xff]
                %384 = vst [vmem:[%s152 + $0x398] sm:$0xff] %v383
                %v385 = vld [vmem:[%s151 + $0x740] sm:$0xff]
                %386 = vst [vmem:[%s152 + $0x3a0] sm:$0xff] %v385
                %v387 = vld [vmem:[%s151 + $0x748] sm:$0xff]
                %388 = vst [vmem:[%s152 + $0x3a8] sm:$0xff] %v387
                %v389 = vld [vmem:[%s151 + $0x750] sm:$0xff]
                %390 = vst [vmem:[%s152 + $0x3b0] sm:$0xff] %v389
                %v391 = vld [vmem:[%s151 + $0x758] sm:$0xff]
                %392 = vst [vmem:[%s152 + $0x3b8] sm:$0xff] %v391
                %v393 = vld [vmem:[%s151 + $0x780] sm:$0xff]
                %394 = vst [vmem:[%s152 + $0x3c0] sm:$0xff] %v393
                %v395 = vld [vmem:[%s151 + $0x788] sm:$0xff]
                %396 = vst [vmem:[%s152 + $0x3c8] sm:$0xff] %v395
                %v397 = vld [vmem:[%s151 + $0x790] sm:$0xff]
                %398 = vst [vmem:[%s152 + $0x3d0] sm:$0xff] %v397
                %v399 = vld [vmem:[%s151 + $0x798] sm:$0xff]
                %400 = vst [vmem:[%s152 + $0x3d8] sm:$0xff] %v399
                %v401 = vld [vmem:[%s151 + $0x7c0] sm:$0xff]
                %402 = vst [vmem:[%s152 + $0x3e0] sm:$0xff] %v401
                %v403 = vld [vmem:[%s151 + $0x7c8] sm:$0xff]
                %404 = vst [vmem:[%s152 + $0x3e8] sm:$0xff] %v403
                %v405 = vld [vmem:[%s151 + $0x7d0] sm:$0xff]
                %406 = vst [vmem:[%s152 + $0x3f0] sm:$0xff] %v405
                %v407 = vld [vmem:[%s151 + $0x7d8] sm:$0xff]
                %408 = vst [vmem:[%s152 + $0x3f8] sm:$0xff] %v407
              $region37: #{dgi_reconstruction.1} parent=31 // loop_footer
                %s150 = sadd.s32 1, %s146
              $region38: #{dgi_reconstruction.1} parent=31 // loop_footer_branch
                %145 = sbr.rel target = $region34
              $region39: #{dgi_reconstruction.1} parent=31 // loop_exit
                _
            $region32: #{dgi_reconstruction.1} parent=27 // pred_fallthru
              _
            // Predicated region
            $region40: #{dgi_reconstruction.1} parent=27 // pred_check
              _
            $region41: #{dgi_reconstruction.1} parent=27 // pred_check_branch
              %410 = sbr.rel target = $region43
            $region42: #{dgi_reconstruction.1} parent=27 // pred_region
              _
            $region43: #{dgi_reconstruction.1} parent=27 // pred_fallthru
              _
          $region28: #{dgi_reconstruction.1} parent=23 // pred_fallthru
            _
          %411 = vnop
        $region24: #{dgi_reconstruction.1} parent=15 // pred_fallthru
          _
      $region16: #{dgi_reconstruction.1} parent=5 // pred_fallthru
        _
      %p412 = scmp.le.s32.totalorder 1, %s8
      %p413 = scmp.lt.s32.totalorder %s8, 5
      %p414 = pnand %p412, %p413
      %p415 = pneg %p414
      // Predicated region
      $region44: #{dgi_reconstruction.1} parent=5 // pred_check
        _
      $region45: #{dgi_reconstruction.1} parent=5 // pred_check_branch
        %417 = sbr.rel (%p414) target = $region47
      $region46: #{dgi_reconstruction.1} parent=5 // pred_region
        %s418 = ssub.s32 %s8, 1
        %s419 = sand.u32 %s61, 1
        %s420 = sand.u32 %s61, 1
        %s421 = smul.addr %s420, 1024
        %s422 = scalar_lea.vmem [#allocation2], %s421
        // Predicated region
        $region48: #{dgi_reconstruction.1} parent=46 // pred_check
          %p423 = pneg %p74
        $region49: #{dgi_reconstruction.1} parent=46 // pred_check_branch
          %425 = sbr.rel (%p423) target = $region51
        $region50: #{dgi_reconstruction.1} parent=46 // pred_region
          _
        $region51: #{dgi_reconstruction.1} parent=46 // pred_fallthru
          _
        %s426 = smul.u32 2, %s18
        %p427 = scmp.lt.s32.totalorder %s426, 3
        %s428 = scalar_select %p427, %s426, 3
        %s429 = smul.addr %s428, 2
        %s430 = scalar_lea.vmem %s0, %s429
        %p431 = pneg %p46
        %p432 = pneg %p43
        %s433 = sand.u32 %s61, 1
        %s434 = sand.u32 %s61, 1
        %s435 = smul.addr %s434, 1024
        %s436 = scalar_lea.vmem [#allocation2], %s435
        %p437 = pneg %p74
        %p438 = pneg %p71
        %p439 = pneg %p100
        %p440 = pneg %p97
        %s441 = smul.u32 4, %s17
        %p442 = scmp.lt.s32.totalorder %s441, 7
        %s443 = scalar_select %p442, %s441, 7
        %s444 = smul.addr %s443, 2
        %s445 = scalar_lea.vmem %s2, %s444
        %s446 = smul.u32 2, %s18
        %p447 = scmp.lt.s32.totalorder %s446, 3
        %s448 = scalar_select %p447, %s446, 3
        %s449 = smul.addr %s448, 2
        %s450 = scalar_lea.vmem %s0, %s449
        %s451 = smul.u32 2, %s18
        %s452 = smul.u32 32, %s18
        %s453 = smul.u32 4, %s17
        %s454 = smul.u32 4, %s17
        %p455 = scmp.lt.s32.totalorder %s454, 7
        %s456 = scalar_select %p455, %s454, 7
        %s457 = smul.addr %s456, 2
        %s458 = scalar_lea.vmem %s2, %s457
        %s459 = smul.u32 4, %s17
        %p460 = scmp.eq.s32.totalorder %s18, 0
        // Predicated region
        $region52: #{dgi_reconstruction.1} parent=46 // pred_check
          %p461 = pneg %p460
        $region53: #{dgi_reconstruction.1} parent=46 // pred_check_branch
          %463 = sbr.rel (%p461) target = $region55
        $region54: #{dgi_reconstruction.1} parent=46 // pred_region
          %464 = vst [vmem:[%s458] sm:$0xff] 0.0
        $region55: #{dgi_reconstruction.1} parent=46 // pred_fallthru
          _
        %v465 = vld [vmem:[%s458] sm:$0xff]
        %v466 = vld [vmem:[%s450] sm:$0xf]
        %v467 = vld [vmem:[%s422] sm:$0xff]
        %v468 = vld [vmem:[%s422 + $0x8] sm:$0xff]
        %v469 = vld [vmem:[%s422 + $0x10] sm:$0xff]
        %v470 = vld [vmem:[%s422 + $0x18] sm:$0xff]
        %v471 = vld [vmem:[%s422 + $0x20] sm:$0xff]
        %v472 = vld [vmem:[%s422 + $0x28] sm:$0xff]
        %v473 = vld [vmem:[%s422 + $0x30] sm:$0xff]
        %v474 = vld [vmem:[%s422 + $0x38] sm:$0xff]
        %v475 = vld [vmem:[%s422 + $0x40] sm:$0xff]
        %v476 = vld [vmem:[%s422 + $0x48] sm:$0xff]
        %v477 = vld [vmem:[%s422 + $0x50] sm:$0xff]
        %v478 = vld [vmem:[%s422 + $0x58] sm:$0xff]
        %v479 = vld [vmem:[%s422 + $0x60] sm:$0xff]
        %v480 = vld [vmem:[%s422 + $0x68] sm:$0xff]
        %v481 = vld [vmem:[%s422 + $0x70] sm:$0xff]
        %v482 = vld [vmem:[%s422 + $0x78] sm:$0xff]
        %v483 = vld [vmem:[%s422 + $0x80] sm:$0xff]
        %v484 = vld [vmem:[%s422 + $0x88] sm:$0xff]
        %v485 = vld [vmem:[%s422 + $0x90] sm:$0xff]
        %v486 = vld [vmem:[%s422 + $0x98] sm:$0xff]
        %v487 = vld [vmem:[%s422 + $0xa0] sm:$0xff]
        %v488 = vld [vmem:[%s422 + $0xa8] sm:$0xff]
        %v489 = vld [vmem:[%s422 + $0xb0] sm:$0xff]
        %v490 = vld [vmem:[%s422 + $0xb8] sm:$0xff]
        %v491 = vld [vmem:[%s422 + $0xc0] sm:$0xff]
        %v492 = vld [vmem:[%s422 + $0xc8] sm:$0xff]
        %v493 = vld [vmem:[%s422 + $0xd0] sm:$0xff]
        %v494 = vld [vmem:[%s422 + $0xd8] sm:$0xff]
        %v495 = vld [vmem:[%s422 + $0xe0] sm:$0xff]
        %v496 = vld [vmem:[%s422 + $0xe8] sm:$0xff]
        %v497 = vld [vmem:[%s422 + $0xf0] sm:$0xff]
        %v498 = vld [vmem:[%s422 + $0xf8] sm:$0xff]
        %v499 = vld [vmem:[%s422 + $0x100] sm:$0xff]
        %v500 = vld [vmem:[%s422 + $0x108] sm:$0xff]
        %v501 = vld [vmem:[%s422 + $0x110] sm:$0xff]
        %v502 = vld [vmem:[%s422 + $0x118] sm:$0xff]
        %v503 = vld [vmem:[%s422 + $0x120] sm:$0xff]
        %v504 = vld [vmem:[%s422 + $0x128] sm:$0xff]
        %v505 = vld [vmem:[%s422 + $0x130] sm:$0xff]
        %v506 = vld [vmem:[%s422 + $0x138] sm:$0xff]
        %v507 = vld [vmem:[%s422 + $0x140] sm:$0xff]
        %v508 = vld [vmem:[%s422 + $0x148] sm:$0xff]
        %v509 = vld [vmem:[%s422 + $0x150] sm:$0xff]
        %v510 = vld [vmem:[%s422 + $0x158] sm:$0xff]
        %v511 = vld [vmem:[%s422 + $0x160] sm:$0xff]
        %v512 = vld [vmem:[%s422 + $0x168] sm:$0xff]
        %v513 = vld [vmem:[%s422 + $0x170] sm:$0xff]
        %v514 = vld [vmem:[%s422 + $0x178] sm:$0xff]
        %v515 = vld [vmem:[%s422 + $0x180] sm:$0xff]
        %v516 = vld [vmem:[%s422 + $0x188] sm:$0xff]
        %v517 = vld [vmem:[%s422 + $0x190] sm:$0xff]
        %v518 = vld [vmem:[%s422 + $0x198] sm:$0xff]
        %v519 = vld [vmem:[%s422 + $0x1a0] sm:$0xff]
        %v520 = vld [vmem:[%s422 + $0x1a8] sm:$0xff]
        %v521 = vld [vmem:[%s422 + $0x1b0] sm:$0xff]
        %v522 = vld [vmem:[%s422 + $0x1b8] sm:$0xff]
        %v523 = vld [vmem:[%s422 + $0x1c0] sm:$0xff]
        %v524 = vld [vmem:[%s422 + $0x1c8] sm:$0xff]
        %v525 = vld [vmem:[%s422 + $0x1d0] sm:$0xff]
        %v526 = vld [vmem:[%s422 + $0x1d8] sm:$0xff]
        %v527 = vld [vmem:[%s422 + $0x1e0] sm:$0xff]
        %v528 = vld [vmem:[%s422 + $0x1e8] sm:$0xff]
        %v529 = vld [vmem:[%s422 + $0x1f0] sm:$0xff]
        %v530 = vld [vmem:[%s422 + $0x1f8] sm:$0xff]
        %v531 = vld [vmem:[%s422 + $0x200] sm:$0xff]
        %v532 = vld [vmem:[%s422 + $0x208] sm:$0xff]
        %v533 = vld [vmem:[%s422 + $0x210] sm:$0xff]
        %v534 = vld [vmem:[%s422 + $0x218] sm:$0xff]
        %v535 = vld [vmem:[%s422 + $0x220] sm:$0xff]
        %v536 = vld [vmem:[%s422 + $0x228] sm:$0xff]
        %v537 = vld [vmem:[%s422 + $0x230] sm:$0xff]
        %v538 = vld [vmem:[%s422 + $0x238] sm:$0xff]
        %v539 = vld [vmem:[%s422 + $0x240] sm:$0xff]
        %v540 = vld [vmem:[%s422 + $0x248] sm:$0xff]
        %v541 = vld [vmem:[%s422 + $0x250] sm:$0xff]
        %v542 = vld [vmem:[%s422 + $0x258] sm:$0xff]
        %v543 = vld [vmem:[%s422 + $0x260] sm:$0xff]
        %v544 = vld [vmem:[%s422 + $0x268] sm:$0xff]
        %v545 = vld [vmem:[%s422 + $0x270] sm:$0xff]
        %v546 = vld [vmem:[%s422 + $0x278] sm:$0xff]
        %v547 = vld [vmem:[%s422 + $0x280] sm:$0xff]
        %v548 = vld [vmem:[%s422 + $0x288] sm:$0xff]
        %v549 = vld [vmem:[%s422 + $0x290] sm:$0xff]
        %v550 = vld [vmem:[%s422 + $0x298] sm:$0xff]
        %v551 = vld [vmem:[%s422 + $0x2a0] sm:$0xff]
        %v552 = vld [vmem:[%s422 + $0x2a8] sm:$0xff]
        %v553 = vld [vmem:[%s422 + $0x2b0] sm:$0xff]
        %v554 = vld [vmem:[%s422 + $0x2b8] sm:$0xff]
        %v555 = vld [vmem:[%s422 + $0x2c0] sm:$0xff]
        %v556 = vld [vmem:[%s422 + $0x2c8] sm:$0xff]
        %v557 = vld [vmem:[%s422 + $0x2d0] sm:$0xff]
        %v558 = vld [vmem:[%s422 + $0x2d8] sm:$0xff]
        %v559 = vld [vmem:[%s422 + $0x2e0] sm:$0xff]
        %v560 = vld [vmem:[%s422 + $0x2e8] sm:$0xff]
        %v561 = vld [vmem:[%s422 + $0x2f0] sm:$0xff]
        %v562 = vld [vmem:[%s422 + $0x2f8] sm:$0xff]
        %v563 = vld [vmem:[%s422 + $0x300] sm:$0xff]
        %v564 = vld [vmem:[%s422 + $0x308] sm:$0xff]
        %v565 = vld [vmem:[%s422 + $0x310] sm:$0xff]
        %v566 = vld [vmem:[%s422 + $0x318] sm:$0xff]
        %v567 = vld [vmem:[%s422 + $0x320] sm:$0xff]
        %v568 = vld [vmem:[%s422 + $0x328] sm:$0xff]
        %v569 = vld [vmem:[%s422 + $0x330] sm:$0xff]
        %v570 = vld [vmem:[%s422 + $0x338] sm:$0xff]
        %v571 = vld [vmem:[%s422 + $0x340] sm:$0xff]
        %v572 = vld [vmem:[%s422 + $0x348] sm:$0xff]
        %v573 = vld [vmem:[%s422 + $0x350] sm:$0xff]
        %v574 = vld [vmem:[%s422 + $0x358] sm:$0xff]
        %v575 = vld [vmem:[%s422 + $0x360] sm:$0xff]
        %v576 = vld [vmem:[%s422 + $0x368] sm:$0xff]
        %v577 = vld [vmem:[%s422 + $0x370] sm:$0xff]
        %v578 = vld [vmem:[%s422 + $0x378] sm:$0xff]
        %v579 = vld [vmem:[%s422 + $0x380] sm:$0xff]
        %v580 = vld [vmem:[%s422 + $0x388] sm:$0xff]
        %v581 = vld [vmem:[%s422 + $0x390] sm:$0xff]
        %v582 = vld [vmem:[%s422 + $0x398] sm:$0xff]
        %v583 = vld [vmem:[%s422 + $0x3a0] sm:$0xff]
        %v584 = vld [vmem:[%s422 + $0x3a8] sm:$0xff]
        %v585 = vld [vmem:[%s422 + $0x3b0] sm:$0xff]
        %v586 = vld [vmem:[%s422 + $0x3b8] sm:$0xff]
        %v587 = vld [vmem:[%s422 + $0x3c0] sm:$0xff]
        %v588 = vld [vmem:[%s422 + $0x3c8] sm:$0xff]
        %v589 = vld [vmem:[%s422 + $0x3d0] sm:$0xff]
        %v590 = vld [vmem:[%s422 + $0x3d8] sm:$0xff]
        %v591 = vld [vmem:[%s422 + $0x3e0] sm:$0xff]
        %v592 = vld [vmem:[%s422 + $0x3e8] sm:$0xff]
        %v593 = vld [vmem:[%s422 + $0x3f0] sm:$0xff]
        %v594 = vld [vmem:[%s422 + $0x3f8] sm:$0xff]
        %v597 = vunpack.c.l.s4 1983009808
        %v598 = vunpack.c.0.s8 %v597
        %v599 = vlaneseq
        %v600 = vshrl.u32 %v599, 7
        %v601 = vsub.s32 %v598, %v600
        %v602 = vrot.slane %v466, %v601
        %v603 = vcombine.high %v602, %v602
        %606 = vmatprep.subr.mxu0 %v468
        %607 = vmatpush1.msra.mxu0 %v467
        %608 = vmatprep.subr.mxu0 %v472
        %609 = vmatpush1.msra.mxu0 %v471
        %610 = vmatprep.subr.mxu0 %v476
        %611 = vmatpush1.msra.mxu0 %v475
        %612 = vmatprep.subr.mxu0 %v480
        %613 = vmatpush1.msra.mxu0 %v479
        %614 = vmatprep.subr.mxu0 %v484
        %615 = vmatpush1.msra.mxu0 %v483
        %616 = vmatprep.subr.mxu0 %v488
        %617 = vmatpush1.msra.mxu0 %v487
        %618 = vmatprep.subr.mxu0 %v492
        %619 = vmatpush1.msra.mxu0 %v491
        %620 = vmatprep.subr.mxu0 %v496
        %621 = vmatpush1.msra.mxu0 %v495
        %622 = vmatprep.subr.mxu0 %v500
        %623 = vmatpush1.msra.mxu0 %v499
        %624 = vmatprep.subr.mxu0 %v504
        %625 = vmatpush1.msra.mxu0 %v503
        %626 = vmatprep.subr.mxu0 %v508
        %627 = vmatpush1.msra.mxu0 %v507
        %628 = vmatprep.subr.mxu0 %v512
        %629 = vmatpush1.msra.mxu0 %v511
        %630 = vmatprep.subr.mxu0 %v516
        %631 = vmatpush1.msra.mxu0 %v515
        %632 = vmatprep.subr.mxu0 %v520
        %633 = vmatpush1.msra.mxu0 %v519
        %634 = vmatprep.subr.mxu0 %v524
        %635 = vmatpush1.msra.mxu0 %v523
        %636 = vmatprep.subr.mxu0 %v528
        %637 = vmatpush1.msra.mxu0 %v527
        %638 = vmatprep.subr.mxu0 %v532
        %639 = vmatpush1.msra.mxu0 %v531
        %640 = vmatprep.subr.mxu0 %v536
        %641 = vmatpush1.msra.mxu0 %v535
        %642 = vmatprep.subr.mxu0 %v540
        %643 = vmatpush1.msra.mxu0 %v539
        %644 = vmatprep.subr.mxu0 %v544
        %645 = vmatpush1.msra.mxu0 %v543
        %646 = vmatprep.subr.mxu0 %v548
        %647 = vmatpush1.msra.mxu0 %v547
        %648 = vmatprep.subr.mxu0 %v552
        %649 = vmatpush1.msra.mxu0 %v551
        %650 = vmatprep.subr.mxu0 %v556
        %651 = vmatpush1.msra.mxu0 %v555
        %652 = vmatprep.subr.mxu0 %v560
        %653 = vmatpush1.msra.mxu0 %v559
        %654 = vmatprep.subr.mxu0 %v564
        %655 = vmatpush1.msra.mxu0 %v563
        %656 = vmatprep.subr.mxu0 %v568
        %657 = vmatpush1.msra.mxu0 %v567
        %658 = vmatprep.subr.mxu0 %v572
        %659 = vmatpush1.msra.mxu0 %v571
        %660 = vmatprep.subr.mxu0 %v576
        %661 = vmatpush1.msra.mxu0 %v575
        %662 = vmatprep.subr.mxu0 %v580
        %663 = vmatpush1.msra.mxu0 %v579
        %664 = vmatprep.subr.mxu0 %v584
        %665 = vmatpush1.msra.mxu0 %v583
        %666 = vmatprep.subr.mxu0 %v588
        %667 = vmatpush1.msra.mxu0 %v587
        %668 = vmatprep.subr.mxu0 %v592
        %669 = vmatpush1.msra.mxu0 %v591
        %670 = vmatprep.mubr.f32.mxu0 %v603
        %671 = vmatmul.mubr.f32.gmra.mrb[0].mxu0 %v602
        %v672 = vpop.f32.mrb[0].mxu0
        %v673 = vadd.f32 0.0, %v672
        %v674 = vpop.f32.mrb[0].mxu0
        %v675 = vadd.f32 0.0, %v674
        %676 = vdwg.mxu0
        %677 = vmatprep.subr.mxu0 %v470
        %678 = vmatpush1.msra.mxu0 %v469
        %679 = vmatprep.subr.mxu0 %v474
        %680 = vmatpush1.msra.mxu0 %v473
        %681 = vmatprep.subr.mxu0 %v478
        %682 = vmatpush1.msra.mxu0 %v477
        %683 = vmatprep.subr.mxu0 %v482
        %684 = vmatpush1.msra.mxu0 %v481
        %685 = vmatprep.subr.mxu0 %v486
        %686 = vmatpush1.msra.mxu0 %v485
        %687 = vmatprep.subr.mxu0 %v490
        %688 = vmatpush1.msra.mxu0 %v489
        %689 = vmatprep.subr.mxu0 %v494
        %690 = vmatpush1.msra.mxu0 %v493
        %691 = vmatprep.subr.mxu0 %v498
        %692 = vmatpush1.msra.mxu0 %v497
        %693 = vmatprep.subr.mxu0 %v502
        %694 = vmatpush1.msra.mxu0 %v501
        %695 = vmatprep.subr.mxu0 %v506
        %696 = vmatpush1.msra.mxu0 %v505
        %697 = vmatprep.subr.mxu0 %v510
        %698 = vmatpush1.msra.mxu0 %v509
        %699 = vmatprep.subr.mxu0 %v514
        %700 = vmatpush1.msra.mxu0 %v513
        %701 = vmatprep.subr.mxu0 %v518
        %702 = vmatpush1.msra.mxu0 %v517
        %703 = vmatprep.subr.mxu0 %v522
        %704 = vmatpush1.msra.mxu0 %v521
        %705 = vmatprep.subr.mxu0 %v526
        %706 = vmatpush1.msra.mxu0 %v525
        %707 = vmatprep.subr.mxu0 %v530
        %708 = vmatpush1.msra.mxu0 %v529
        %709 = vmatprep.subr.mxu0 %v534
        %710 = vmatpush1.msra.mxu0 %v533
        %711 = vmatprep.subr.mxu0 %v538
        %712 = vmatpush1.msra.mxu0 %v537
        %713 = vmatprep.subr.mxu0 %v542
        %714 = vmatpush1.msra.mxu0 %v541
        %715 = vmatprep.subr.mxu0 %v546
        %716 = vmatpush1.msra.mxu0 %v545
        %717 = vmatprep.subr.mxu0 %v550
        %718 = vmatpush1.msra.mxu0 %v549
        %719 = vmatprep.subr.mxu0 %v554
        %720 = vmatpush1.msra.mxu0 %v553
        %721 = vmatprep.subr.mxu0 %v558
        %722 = vmatpush1.msra.mxu0 %v557
        %723 = vmatprep.subr.mxu0 %v562
        %724 = vmatpush1.msra.mxu0 %v561
        %725 = vmatprep.subr.mxu0 %v566
        %726 = vmatpush1.msra.mxu0 %v565
        %727 = vmatprep.subr.mxu0 %v570
        %728 = vmatpush1.msra.mxu0 %v569
        %729 = vmatprep.subr.mxu0 %v574
        %730 = vmatpush1.msra.mxu0 %v573
        %731 = vmatprep.subr.mxu0 %v578
        %732 = vmatpush1.msra.mxu0 %v577
        %733 = vmatprep.subr.mxu0 %v582
        %734 = vmatpush1.msra.mxu0 %v581
        %735 = vmatprep.subr.mxu0 %v586
        %736 = vmatpush1.msra.mxu0 %v585
        %737 = vmatprep.subr.mxu0 %v590
        %738 = vmatpush1.msra.mxu0 %v589
        %739 = vmatprep.subr.mxu0 %v594
        %740 = vmatpush1.msra.mxu0 %v593
        %741 = vmatprep.mubr.f32.mxu0 %v603
        %742 = vmatmul.mubr.f32.gmra.mrb[0].mxu0 %v602
        %v743 = vpop.f32.mrb[0].mxu0
        %v744 = vadd.f32 0.0, %v743
        %v745 = vpop.f32.mrb[0].mxu0
        %v746 = vadd.f32 0.0, %v745
        %747 = vdwg.mxu0
        %v752 = vcombine.low %v673, %v675
        %v753 = vcombine.low %v744, %v746
        %v755 = vunpack.c.l.s4 1983009808
        %v756 = vunpack.c.0.s8 %v755
        %v757 = vlaneseq
        %v758 = vshrl.u32 %v757, 7
        %v759 = vsub.s32 %v756, %v758
        %v760 = vrot.slane %v752, %v759
        %v762 = vunpack.c.l.s4 1983009808
        %v763 = vunpack.c.0.s8 %v762
        %v764 = vlaneseq
        %v765 = vshrl.u32 %v764, 7
        %v766 = vsub.s32 %v763, %v765
        %v767 = vrot.slane %v753, %v766
        %v768 = vcombine.low %v760, %v767
        %v770 = vadd.f32 %v465, %v768
        %771 = vst [vmem:[%s458] sm:$0xff] %v770
        %s772 = smul.u32 4, %s17
        %p773 = scmp.lt.s32.totalorder %s772, 7
        %s774 = scalar_select %p773, %s772, 7
        %s775 = smul.addr %s774, 2
        %s776 = scalar_lea.vmem %s2, %s775
        // Predicated region
        $region56: #{dgi_reconstruction.1} parent=46 // pred_check
          %p777 = pneg %p97
        $region57: #{dgi_reconstruction.1} parent=46 // pred_check_branch
          %779 = sbr.rel (%p777) target = $region59
        $region58: #{dgi_reconstruction.1} parent=46 // pred_region
          %s780 = smul.u32 4, %s17
        $region59: #{dgi_reconstruction.1} parent=46 // pred_fallthru
          _
      $region47: #{dgi_reconstruction.1} parent=5 // pred_fallthru
        _
      %p781 = scmp.le.s32.totalorder 2, %s8
      // Predicated region
      $region60: #{dgi_reconstruction.1} parent=5 // pred_check
        %p782 = pneg %p781
      $region61: #{dgi_reconstruction.1} parent=5 // pred_check_branch
        %784 = sbr.rel (%p782) target = $region63
      $region62: #{dgi_reconstruction.1} parent=5 // pred_region
        %s785 = ssub.s32 %s8, 2
        // Predicated region
        $region64: #{dgi_reconstruction.1} parent=62 // pred_check
          %p786 = pneg %p103
        $region65: #{dgi_reconstruction.1} parent=62 // pred_check_branch
          %788 = sbr.rel (%p786) target = $region67
        $region66: #{dgi_reconstruction.1} parent=62 // pred_region
          %s789 = smul.u32 4, %s19
          %p790 = scmp.lt.s32.totalorder %s789, 7
          %s791 = scalar_select %p790, %s789, 7
          %s792 = smul.addr %s791, 2
          %s793 = scalar_lea.vmem %s2, %s792
        $region67: #{dgi_reconstruction.1} parent=62 // pred_fallthru
          _
      $region63: #{dgi_reconstruction.1} parent=5 // pred_fallthru
        _
    $region6: #{dgi_reconstruction.1} parent=1 // loop_footer
      %s12 = sadd.s32 1, %s8
    $region7: #{dgi_reconstruction.1} parent=1 // loop_footer_branch
      %7 = sbr.rel target = $region3
    $region8: #{dgi_reconstruction.1} parent=1 // loop_exit
      _

</llo_original>
